<compile_context>
chip_gen: v7x
topology: tpu7x:2x2x1
jax: 0.10.0
libtpu: 0.0.40
codegen_flags: <defaults>
</compile_context>

<pallas_src>
import jax
import jax.numpy as jnp
from jax.experimental import pallas as pl
from jax.experimental.pallas import tpu as pltpu

# MuJoCo-like sizes (small hopper-ish env) + synthetic MLP width.
NQ, NV, NU = 7, 6, 3
HIDDEN = 32
D_IN = NQ + NV + NU          # model input  = nq + nv + nu  = 16
D_OUT = NQ + NV              # model output = nq + nv       = 13


def dynamics_kernel(xT_ref, w1T_ref, b1_ref, w2T_ref, b2_ref, outT_ref):
    # xT: [D_IN, TB]  -- features on sublanes, batch on lanes (lane-dense).
    xT = xT_ref[...]

    # model(x): Linear(D_IN, HIDDEN) -> ReLU -> Linear(HIDDEN, D_OUT),
    # expressed in transposed form:  h = W1 @ x^T,  delta = W2 @ relu(h).
    h = jnp.dot(w1T_ref[...], xT, preferred_element_type=jnp.float32) + b1_ref[...]
    h = jnp.maximum(h, 0.0)
    delta = (jnp.dot(w2T_ref[...], h, preferred_element_type=jnp.float32)
             + b2_ref[...])

    # MuJoCoDelta (additive residual): [qpos | qvel] are the first D_OUT rows
    # of xT and delta is laid out [delta_qpos | delta_qvel], so this is a
    # single elementwise add on a sublane slice.
    outT_ref[...] = xT[:D_OUT, :] + delta


def mujoco_dynamics_flat(x, w1, b1, w2, b2, *, batch_tile=512):
    """x: [B, D_IN] f32; w1: [D_IN, HIDDEN]; b1: [1, HIDDEN];
    w2: [HIDDEN, D_OUT]; b2: [1, D_OUT].  Returns [B, D_OUT]."""
    B = x.shape[0]

    # Lane/batch tile: multiple of 128, shrunk for tiny batches.
    tile = min(batch_tile, ((B + 127) // 128) * 128)
    b_pad = pl.cdiv(B, tile) * tile

    # Transpose so batch lands on lanes; zero-pad the batch axis to the tile.
    xT = jnp.zeros((D_IN, b_pad), jnp.float32).at[:, :B].set(x.T)
    w1T = w1.T                      # [HIDDEN, D_IN]
    w2T = w2.T                      # [D_OUT, HIDDEN]
    b1c = b1.reshape(HIDDEN, 1)     # broadcast over lanes in-kernel
    b2c = b2.reshape(D_OUT, 1)

    outT = pl.pallas_call(
        dynamics_kernel,
        out_shape=jax.ShapeDtypeStruct((D_OUT, b_pad), jnp.float32),
        grid_spec=pltpu.PrefetchScalarGridSpec(
            num_scalar_prefetch=0,
            grid=(b_pad // tile,),
            in_specs=[
                # Streamed batch tiles (lane dim).
                pl.BlockSpec((D_IN, tile), lambda i: (0, i)),
                # Weights/biases: constant index_map -> VMEM-resident across
                # all grid steps (weight DMA paid once).
                pl.BlockSpec((HIDDEN, D_IN), lambda i: (0, 0)),
                pl.BlockSpec((HIDDEN, 1), lambda i: (0, 0)),
                pl.BlockSpec((D_OUT, HIDDEN), lambda i: (0, 0)),
                pl.BlockSpec((D_OUT, 1), lambda i: (0, 0)),
            ],
            out_specs=pl.BlockSpec((D_OUT, tile), lambda i: (0, i)),
        ),
        compiler_params=pltpu.CompilerParams(
            dimension_semantics=("parallel",),          # megacore-shardable
            vmem_limit_bytes=64 * 1024 * 1024,
        ),
    )(xT, w1T, b1c, w2T, b2c)

    # Back to the caller's [B, D_OUT] feature-last layout.
    return outT[:, :B].T


def reference(x, w1, b1, w2, b2):
    h = jnp.maximum(x @ w1 + b1, 0.0)
    delta = h @ w2 + b2
    qpos, qvel = x[:, :NQ], x[:, NQ:NQ + NV]
    dqpos, dqvel = delta[:, :NQ], delta[:, NQ:]
    return jnp.concatenate([qpos + dqpos, qvel + dqvel], axis=-1)


if __name__ == "__main__":
    key = jax.random.PRNGKey(0)
    kx, k1, k2, k3, k4 = jax.random.split(key, 5)

    B = 8
    x = jax.random.normal(kx, (B, D_IN), dtype=jnp.float32)

    # Deterministic synthetic parameters for the inner `model` MLP.
    w1 = 0.1 * jax.random.normal(k1, (D_IN, HIDDEN), dtype=jnp.float32)
    b1 = 0.1 * jax.random.normal(k2, (1, HIDDEN), dtype=jnp.float32)
    w2 = 0.1 * jax.random.normal(k3, (HIDDEN, D_OUT), dtype=jnp.float32)
    b2 = 0.1 * jax.random.normal(k4, (1, D_OUT), dtype=jnp.float32)

    out = mujoco_dynamics_flat(x, w1, b1, w2, b2)
    out = jax.block_until_ready(out)

    ref = reference(x, w1, b1, w2, b2)
    assert out.shape == (B, D_OUT), out.shape
    assert jnp.allclose(out, ref, atol=1e-5, rtol=1e-5)

    print("KERNEL_OK")
</pallas_src>

<mosaic_0001>
module attributes {stable_mosaic.version = 11 : i64} {
  func.func @dynamics_kernel(%arg0: i32, %arg1: memref<16x128xf32, #tpu.memory_space<vmem>>, %arg2: memref<32x16xf32, #tpu.memory_space<vmem>>, %arg3: memref<32x1xf32, #tpu.memory_space<vmem>>, %arg4: memref<13x32xf32, #tpu.memory_space<vmem>>, %arg5: memref<13x1xf32, #tpu.memory_space<vmem>>, %arg6: memref<13x128xf32, #tpu.memory_space<vmem>>) attributes {dimension_semantics = [#tpu.dimension_semantics<parallel>], iteration_bounds = array<i64: 1>, scalar_prefetch = 0 : i64, scratch_operands = 0 : i64, tpu.core_type = #tpu.core_type<tc>, window_params = [{transform_indices = @transform_0, window_bounds = array<i64: 16, 128>}, {pipeline_mode = #tpu.pipeline_mode<synchronous>, transform_indices = @transform_1, window_bounds = array<i64: 32, 16>}, {pipeline_mode = #tpu.pipeline_mode<synchronous>, transform_indices = @transform_2, window_bounds = array<i64: 32, 1>}, {pipeline_mode = #tpu.pipeline_mode<synchronous>, transform_indices = @transform_3, window_bounds = array<i64: 13, 32>}, {pipeline_mode = #tpu.pipeline_mode<synchronous>, transform_indices = @transform_4, window_bounds = array<i64: 13, 1>}, {transform_indices = @transform_5, window_bounds = array<i64: 13, 128>}]} {
    %c0 = arith.constant 0 : index
    %c0_0 = arith.constant 0 : index
    %0 = vector.load %arg1[%c0, %c0_0] : memref<16x128xf32, #tpu.memory_space<vmem>>, vector<16x128xf32>
    %c0_1 = arith.constant 0 : index
    %c0_2 = arith.constant 0 : index
    %1 = vector.load %arg2[%c0_1, %c0_2] : memref<32x16xf32, #tpu.memory_space<vmem>>, vector<32x16xf32>
    %cst = arith.constant dense<0.000000e+00> : vector<32x128xf32>
    %2 = tpu.matmul %1, %0, %cst {dimension_numbers = #tpu.dot_dimension_numbers<[1], [0], [0], [1], [0, 0, 1, 1], [], []>} : vector<32x16xf32>, vector<16x128xf32>, vector<32x128xf32> -> vector<32x128xf32>
    %c0_3 = arith.constant 0 : index
    %c0_4 = arith.constant 0 : index
    %3 = vector.load %arg3[%c0_3, %c0_4] : memref<32x1xf32, #tpu.memory_space<vmem>>, vector<32x1xf32>
    %4 = vector.broadcast %3 : vector<32x1xf32> to vector<32x128xf32>
    %5 = arith.addf %2, %4 : vector<32x128xf32>
    %cst_5 = arith.constant 0.000000e+00 : f32
    %6 = vector.broadcast %cst_5 : f32 to vector<32x128xf32>
    %7 = arith.maximumf %5, %6 : vector<32x128xf32>
    %c0_6 = arith.constant 0 : index
    %c0_7 = arith.constant 0 : index
    %8 = vector.load %arg4[%c0_6, %c0_7] : memref<13x32xf32, #tpu.memory_space<vmem>>, vector<13x32xf32>
    %cst_8 = arith.constant dense<0.000000e+00> : vector<13x128xf32>
    %9 = tpu.matmul %8, %7, %cst_8 {dimension_numbers = #tpu.dot_dimension_numbers<[1], [0], [0], [1], [0, 0, 1, 1], [], []>} : vector<13x32xf32>, vector<32x128xf32>, vector<13x128xf32> -> vector<13x128xf32>
    %c0_9 = arith.constant 0 : index
    %c0_10 = arith.constant 0 : index
    %10 = vector.load %arg5[%c0_9, %c0_10] : memref<13x1xf32, #tpu.memory_space<vmem>>, vector<13x1xf32>
    %11 = vector.broadcast %10 : vector<13x1xf32> to vector<13x128xf32>
    %12 = arith.addf %9, %11 : vector<13x128xf32>
    %13 = vector.extract_strided_slice %0 {offsets = [0, 0], sizes = [13, 128], strides = [1, 1]} : vector<16x128xf32> to vector<13x128xf32>
    %14 = arith.addf %13, %12 : vector<13x128xf32>
    %c0_11 = arith.constant 0 : index
    %c0_12 = arith.constant 0 : index
    %15 = vector.load %arg6[%c0_11, %c0_12] : memref<13x128xf32, #tpu.memory_space<vmem>>, vector<13x128xf32>
    tpu.vector_store %arg6[%c0_11, %c0_12], %14 {strides = array<i32>} : memref<13x128xf32, #tpu.memory_space<vmem>>, vector<13x128xf32>,
    return
  }
  func.func @transform_0(%arg0: i32) -> (i32, i32) {
    %c0_i32 = arith.constant 0 : i32
    %c0_i32_0 = arith.constant 0 : i32
    return %c0_i32, %arg0 : i32, i32
  }
  func.func @transform_1(%arg0: i32) -> (i32, i32) {
    %c0_i32 = arith.constant 0 : i32
    %c0_i32_0 = arith.constant 0 : i32
    %c0_i32_1 = arith.constant 0 : i32
    return %c0_i32, %c0_i32_0 : i32, i32
  }
  func.func @transform_2(%arg0: i32) -> (i32, i32) {
    %c0_i32 = arith.constant 0 : i32
    %c0_i32_0 = arith.constant 0 : i32
    %c0_i32_1 = arith.constant 0 : i32
    return %c0_i32, %c0_i32_0 : i32, i32
  }
  func.func @transform_3(%arg0: i32) -> (i32, i32) {
    %c0_i32 = arith.constant 0 : i32
    %c0_i32_0 = arith.constant 0 : i32
    %c0_i32_1 = arith.constant 0 : i32
    return %c0_i32, %c0_i32_0 : i32, i32
  }
  func.func @transform_4(%arg0: i32) -> (i32, i32) {
    %c0_i32 = arith.constant 0 : i32
    %c0_i32_0 = arith.constant 0 : i32
    %c0_i32_1 = arith.constant 0 : i32
    return %c0_i32, %c0_i32_0 : i32, i32
  }
  func.func @transform_5(%arg0: i32) -> (i32, i32) {
    %c0_i32 = arith.constant 0 : i32
    %c0_i32_0 = arith.constant 0 : i32
    return %c0_i32, %arg0 : i32, i32
  }
}

</mosaic_0001>

<llo_original>
// kernel: tpu_custom_call.1
$region0: #{tpu_custom_call.1}
  #allocation0 [shape = 'u32[]', space=smem, size = 0x4, offset = 0x4, fixed_abs, tag = 'smem constant byte address 0x4 - core index']
  #allocation1 [shape = 'u32[144,128]{1,0:T(1,128)}', space=vmem, size = 0x12000, scoped, tag = 'internal scratch']
  %s0 = inlined_call_operand.hbm [shape: f32[16,128], index: 0, kind: input, shape index: {}]
  %s1 = inlined_call_operand.hbm [shape: f32[32,16], index: 1, kind: input, shape index: {}]
  %s2 = inlined_call_operand.hbm [shape: f32[32,1], index: 2, kind: input, shape index: {}]
  %s3 = inlined_call_operand.hbm [shape: f32[13,32], index: 3, kind: input, shape index: {}]
  %s4 = inlined_call_operand.hbm [shape: f32[13,1], index: 4, kind: input, shape index: {}]
  %s5 = inlined_call_operand.hbm [shape: f32[13,128], index: 5, kind: output, shape index: {}]
  %s6 = sld [smem:[#allocation0]]
  $region50: #{tpu_custom_call.1} parent=0
    _
  %s8 = ssub.s32 1, %s6
  %s9 = scalar_select 0, %s8, %s6
  $region1: #{tpu_custom_call.1} parent=0
    #allocation2 [shape = 'u8[8192]{0}', space=vmem, size = 0x2000, scoped, tag = 'input window, operand 0, single buffered']
    #allocation3 [shape = 's32[1]{0}', space=sflag, size = 0x4, scoped, tag = 'scoped memory for tpu_custom_call.1']
    #allocation4 [shape = 's32[1]{0}', space=sflag, size = 0x4, scoped, tag = 'scoped memory for tpu_custom_call.1']
    #allocation5 [shape = 'u8[16384]{0}', space=vmem, size = 0x4000, scoped, tag = 'input window, operand 1, single buffered']
    #allocation6 [shape = 's32[1]{0}', space=sflag, size = 0x4, scoped, tag = 'scoped memory for tpu_custom_call.1']
    #allocation7 [shape = 'u8[16384]{0}', space=vmem, size = 0x4000, scoped, tag = 'input window, operand 2, single buffered']
    #allocation8 [shape = 'u8[8192]{0}', space=vmem, size = 0x2000, scoped, tag = 'input window, operand 3, single buffered']
    #allocation9 [shape = 's32[1]{0}', space=sflag, size = 0x4, scoped, tag = 'scoped memory for tpu_custom_call.1']
    #allocation10 [shape = 'u8[8192]{0}', space=vmem, size = 0x2000, scoped, tag = 'input window, operand 4, single buffered']
    #allocation11 [shape = 'u8[8192]{0}', space=vmem, size = 0x2000, scoped, tag = 'output window, operand 0, single buffered']
    %10 = vsyncpa [#allocation3], 0
    %11 = vsyncpa [#allocation6], 0
    %12 = vsyncpa [#allocation9], 0
    %13 = vsyncpa [#allocation4], 0
    // Predicated region
    $region2: #{tpu_custom_call.1} parent=1 // pred_check
      _
    $region3: #{tpu_custom_call.1} parent=1 // pred_check_branch
      %15 = sbr.rel (0) target = $region5
    $region4: #{tpu_custom_call.1} parent=1 // pred_region
      %s17 = ssub.s32 256, 256
      %18 = vsyncadd [#allocation3], %s17
      %s19 = sshll.u32 [#allocation2], 4
      %s20 = int_to_ptr.vmem [resolvable:$true] %s19
      %25 = dma.hbm_to_vmem [thread:$0]  %s0, 256, %s20, [#allocation3], 128, 128, 8
    $region5: #{tpu_custom_call.1} parent=1 // pred_fallthru
      _
    // Predicated region
    $region6: #{tpu_custom_call.1} parent=1 // pred_check
      _
    $region7: #{tpu_custom_call.1} parent=1 // pred_check_branch
      %27 = sbr.rel (0) target = $region9
    $region8: #{tpu_custom_call.1} parent=1 // pred_region
      %s29 = ssub.s32 512, 512
      %30 = vsyncadd [#allocation6], %s29
      %s31 = sshll.u32 [#allocation5], 4
      %s32 = int_to_ptr.vmem [resolvable:$true] %s31
      %37 = dma.hbm_to_vmem [thread:$0]  %s1, 512, %s32, [#allocation6], 128, 128, 8
    $region9: #{tpu_custom_call.1} parent=1 // pred_fallthru
      _
    // Predicated region
    $region10: #{tpu_custom_call.1} parent=1 // pred_check
      _
    $region11: #{tpu_custom_call.1} parent=1 // pred_check_branch
      %39 = sbr.rel (0) target = $region13
    $region12: #{tpu_custom_call.1} parent=1 // pred_region
      %s41 = ssub.s32 512, 512
      %42 = vsyncadd [#allocation6], %s41
      %s43 = sshll.u32 [#allocation7], 4
      %s44 = int_to_ptr.vmem [resolvable:$true] %s43
      %49 = dma.hbm_to_vmem [thread:$0]  %s2, 512, %s44, [#allocation6], 128, 128, 8
    $region13: #{tpu_custom_call.1} parent=1 // pred_fallthru
      _
    // Predicated region
    $region14: #{tpu_custom_call.1} parent=1 // pred_check
      _
    $region15: #{tpu_custom_call.1} parent=1 // pred_check_branch
      %51 = sbr.rel (0) target = $region17
    $region16: #{tpu_custom_call.1} parent=1 // pred_region
      %s53 = ssub.s32 256, 256
      %54 = vsyncadd [#allocation9], %s53
      %s55 = sshll.u32 [#allocation8], 4
      %s56 = int_to_ptr.vmem [resolvable:$true] %s55
      %61 = dma.hbm_to_vmem [thread:$0]  %s3, 256, %s56, [#allocation9], 128, 128, 8
    $region17: #{tpu_custom_call.1} parent=1 // pred_fallthru
      _
    // Predicated region
    $region18: #{tpu_custom_call.1} parent=1 // pred_check
      _
    $region19: #{tpu_custom_call.1} parent=1 // pred_check_branch
      %63 = sbr.rel (0) target = $region21
    $region20: #{tpu_custom_call.1} parent=1 // pred_region
      %s65 = ssub.s32 256, 256
      %66 = vsyncadd [#allocation9], %s65
      %s67 = sshll.u32 [#allocation10], 4
      %s68 = int_to_ptr.vmem [resolvable:$true] %s67
      %73 = dma.hbm_to_vmem [thread:$0]  %s4, 256, %s68, [#allocation9], 128, 128, 8
    $region21: #{tpu_custom_call.1} parent=1 // pred_fallthru
      _
    // Predicated region
    $region22: #{tpu_custom_call.1} parent=1 // pred_check
      _
    $region23: #{tpu_custom_call.1} parent=1 // pred_check_branch
      %75 = sbr.rel (0) target = $region25
    $region24: #{tpu_custom_call.1} parent=1 // pred_region
      %76 = dma.done [#allocation3], 256
    $region25: #{tpu_custom_call.1} parent=1 // pred_fallthru
      _
    // Predicated region
    $region26: #{tpu_custom_call.1} parent=1 // pred_check
      _
    $region27: #{tpu_custom_call.1} parent=1 // pred_check_branch
      %78 = sbr.rel (0) target = $region29
    $region28: #{tpu_custom_call.1} parent=1 // pred_region
      %79 = dma.done [#allocation6], 512
    $region29: #{tpu_custom_call.1} parent=1 // pred_fallthru
      _
    // Predicated region
    $region30: #{tpu_custom_call.1} parent=1 // pred_check
      _
    $region31: #{tpu_custom_call.1} parent=1 // pred_check_branch
      %81 = sbr.rel (0) target = $region33
    $region32: #{tpu_custom_call.1} parent=1 // pred_region
      %82 = dma.done [#allocation6], 512
    $region33: #{tpu_custom_call.1} parent=1 // pred_fallthru
      _
    // Predicated region
    $region34: #{tpu_custom_call.1} parent=1 // pred_check
      _
    $region35: #{tpu_custom_call.1} parent=1 // pred_check_branch
      %84 = sbr.rel (0) target = $region37
    $region36: #{tpu_custom_call.1} parent=1 // pred_region
      %85 = dma.done [#allocation9], 256
    $region37: #{tpu_custom_call.1} parent=1 // pred_fallthru
      _
    // Predicated region
    $region38: #{tpu_custom_call.1} parent=1 // pred_check
      _
    $region39: #{tpu_custom_call.1} parent=1 // pred_check_branch
      %87 = sbr.rel (0) target = $region41
    $region40: #{tpu_custom_call.1} parent=1 // pred_region
      %88 = dma.done [#allocation9], 256
    $region41: #{tpu_custom_call.1} parent=1 // pred_fallthru
      _
    %v89 = vld [vmem:[#allocation2] sm:$0xff]
    %v90 = vld [vmem:[#allocation2 + $0x8] sm:$0xff]
    %v91 = vld [vmem:[#allocation5] sm:$0xff]
    %v92 = vld [vmem:[#allocation5 + $0x8] sm:$0xff]
    %v93 = vld [vmem:[#allocation5 + $0x10] sm:$0xff]
    %v94 = vld [vmem:[#allocation5 + $0x18] sm:$0xff]
    %v95 = vld [vmem:[#allocation7] sm:$0xff]
    %v96 = vld [vmem:[#allocation7 + $0x8] sm:$0xff]
    %v97 = vld [vmem:[#allocation7 + $0x10] sm:$0xff]
    %v98 = vld [vmem:[#allocation7 + $0x18] sm:$0xff]
    %100 = vset.pattern.permute.xlu0 0
    %101 = vperm.xlu0 %100, %v95
    %v102 = vpop.permute.xlu0 %101
    %105 = vset.pattern.permute.xlu0 0
    %106 = vperm.xlu0 %105, %v96
    %v107 = vpop.permute.xlu0 %106
    %110 = vset.pattern.permute.xlu0 0
    %111 = vperm.xlu0 %110, %v97
    %v112 = vpop.permute.xlu0 %111
    %115 = vset.pattern.permute.xlu0 0
    %116 = vperm.xlu0 %115, %v98
    %v117 = vpop.permute.xlu0 %116
    %vm119 = vcmask 130048
    %v121 = vsel %vm119, %v91, 0
    %v124 = vsel %vm119, %v92, 0
    %v127 = vsel %vm119, %v93, 0
    %v130 = vsel %vm119, %v94, 0
    %132 = vmatprep.subr.mxu0 0.0
    %133 = vmatpush1.msra.mxu0 %v89
    %134 = vmatprep.subr.mxu0 0.0
    %135 = vmatpush1.msra.mxu0 %v90
    %136 = vmatprep.subr.mxu0 0.0
    %137 = vmatpush1.msra.mxu0 0.0
    %138 = vmatprep.subr.mxu0 0.0
    %139 = vmatpush1.msra.mxu0 0.0
    %140 = vmatprep.subr.mxu0 0.0
    %141 = vmatpush1.msra.mxu0 0.0
    %142 = vmatprep.subr.mxu0 0.0
    %143 = vmatpush1.msra.mxu0 0.0
    %144 = vmatprep.subr.mxu0 0.0
    %145 = vmatpush1.msra.mxu0 0.0
    %146 = vmatprep.subr.mxu0 0.0
    %147 = vmatpush1.msra.mxu0 0.0
    %148 = vmatprep.subr.mxu0 0.0
    %149 = vmatpush1.msra.mxu0 0.0
    %150 = vmatprep.subr.mxu0 0.0
    %151 = vmatpush1.msra.mxu0 0.0
    %152 = vmatprep.subr.mxu0 0.0
    %153 = vmatpush1.msra.mxu0 0.0
    %154 = vmatprep.subr.mxu0 0.0
    %155 = vmatpush1.msra.mxu0 0.0
    %156 = vmatprep.subr.mxu0 0.0
    %157 = vmatpush1.msra.mxu0 0.0
    %158 = vmatprep.subr.mxu0 0.0
    %159 = vmatpush1.msra.mxu0 0.0
    %160 = vmatprep.subr.mxu0 0.0
    %161 = vmatpush1.msra.mxu0 0.0
    %162 = vmatprep.subr.mxu0 0.0
    %163 = vmatpush1.msra.mxu0 0.0
    %164 = vmatprep.subr.mxu0 0.0
    %165 = vmatpush1.msra.mxu0 0.0
    %166 = vmatprep.subr.mxu0 0.0
    %167 = vmatpush1.msra.mxu0 0.0
    %168 = vmatprep.subr.mxu0 0.0
    %169 = vmatpush1.msra.mxu0 0.0
    %170 = vmatprep.subr.mxu0 0.0
    %171 = vmatpush1.msra.mxu0 0.0
    %172 = vmatprep.subr.mxu0 0.0
    %173 = vmatpush1.msra.mxu0 0.0
    %174 = vmatprep.subr.mxu0 0.0
    %175 = vmatpush1.msra.mxu0 0.0
    %176 = vmatprep.subr.mxu0 0.0
    %177 = vmatpush1.msra.mxu0 0.0
    %178 = vmatprep.subr.mxu0 0.0
    %179 = vmatpush1.msra.mxu0 0.0
    %180 = vmatprep.subr.mxu0 0.0
    %181 = vmatpush1.msra.mxu0 0.0
    %182 = vmatprep.subr.mxu0 0.0
    %183 = vmatpush1.msra.mxu0 0.0
    %184 = vmatprep.subr.mxu0 0.0
    %185 = vmatpush1.msra.mxu0 0.0
    %186 = vmatprep.subr.mxu0 0.0
    %187 = vmatpush1.msra.mxu0 0.0
    %188 = vmatprep.subr.mxu0 0.0
    %189 = vmatpush1.msra.mxu0 0.0
    %190 = vmatprep.subr.mxu0 0.0
    %191 = vmatpush1.msra.mxu0 0.0
    %192 = vmatprep.subr.mxu0 0.0
    %193 = vmatpush1.msra.mxu0 0.0
    %194 = vmatprep.subr.mxu0 0.0
    %195 = vmatpush1.msra.mxu0 0.0
    %196 = vmatprep.mubr.f32.mxu0 0.0
    %197 = vmatmul.mubr.f32.gmra.mrb[0].mxu0 %v121
    %v198 = vpop.f32.mrb[0].mxu0
    %v199 = vadd.f32 %v102, %v198
    %v200 = vpop.f32.mrb[0].mxu0
    %201 = vmatprep.mubr.f32.mxu0 0.0
    %202 = vmatmul.mubr.f32.gmra.mrb[0].mxu0 %v124
    %v203 = vpop.f32.mrb[0].mxu0
    %v204 = vadd.f32 %v107, %v203
    %v205 = vpop.f32.mrb[0].mxu0
    %206 = vmatprep.mubr.f32.mxu0 0.0
    %207 = vmatmul.mubr.f32.gmra.mrb[0].mxu0 %v127
    %v208 = vpop.f32.mrb[0].mxu0
    %v209 = vadd.f32 %v112, %v208
    %v210 = vpop.f32.mrb[0].mxu0
    %211 = vmatprep.mubr.f32.mxu0 0.0
    %212 = vmatmul.mubr.f32.gmra.mrb[0].mxu0 %v130
    %v213 = vpop.f32.mrb[0].mxu0
    %v214 = vadd.f32 %v117, %v213
    %v215 = vpop.f32.mrb[0].mxu0
    %216 = vdwg.mxu0
    %v217 = vmax.f32 %v199, 0.0
    %v218 = vmax.f32 %v204, 0.0
    %v219 = vmax.f32 %v209, 0.0
    %v220 = vmax.f32 %v214, 0.0
    %v221 = vld [vmem:[#allocation8] sm:$0xff]
    %v222 = vld [vmem:[#allocation8 + $0x8] sm:$0x1f]
    %v223 = vld [vmem:[#allocation10] sm:$0xff]
    %v224 = vld [vmem:[#allocation10 + $0x8] sm:$0x1f]
    %226 = vset.pattern.permute.xlu0 0
    %227 = vperm.xlu0 %226, %v223
    %v228 = vpop.permute.xlu0 %227
    %231 = vset.pattern.permute.xlu0 0
    %232 = vperm.xlu0 %231, %v224
    %v233 = vpop.permute.xlu0 %232
    %vm235 = vcmask 261120
    %v237 = vsel %vm235, %v221, 0
    %v240 = vsel %vm235, %v222, 0
    %242 = vmatprep.subr.mxu0 0.0
    %243 = vmatpush1.msra.mxu0 %v217
    %244 = vmatprep.subr.mxu0 0.0
    %245 = vmatpush1.msra.mxu0 %v218
    %246 = vmatprep.subr.mxu0 0.0
    %247 = vmatpush1.msra.mxu0 %v219
    %248 = vmatprep.subr.mxu0 0.0
    %249 = vmatpush1.msra.mxu0 %v220
    %250 = vmatprep.subr.mxu0 0.0
    %251 = vmatpush1.msra.mxu0 0.0
    %252 = vmatprep.subr.mxu0 0.0
    %253 = vmatpush1.msra.mxu0 0.0
    %254 = vmatprep.subr.mxu0 0.0
    %255 = vmatpush1.msra.mxu0 0.0
    %256 = vmatprep.subr.mxu0 0.0
    %257 = vmatpush1.msra.mxu0 0.0
    %258 = vmatprep.subr.mxu0 0.0
    %259 = vmatpush1.msra.mxu0 0.0
    %260 = vmatprep.subr.mxu0 0.0
    %261 = vmatpush1.msra.mxu0 0.0
    %262 = vmatprep.subr.mxu0 0.0
    %263 = vmatpush1.msra.mxu0 0.0
    %264 = vmatprep.subr.mxu0 0.0
    %265 = vmatpush1.msra.mxu0 0.0
    %266 = vmatprep.subr.mxu0 0.0
    %267 = vmatpush1.msra.mxu0 0.0
    %268 = vmatprep.subr.mxu0 0.0
    %269 = vmatpush1.msra.mxu0 0.0
    %270 = vmatprep.subr.mxu0 0.0
    %271 = vmatpush1.msra.mxu0 0.0
    %272 = vmatprep.subr.mxu0 0.0
    %273 = vmatpush1.msra.mxu0 0.0
    %274 = vmatprep.subr.mxu0 0.0
    %275 = vmatpush1.msra.mxu0 0.0
    %276 = vmatprep.subr.mxu0 0.0
    %277 = vmatpush1.msra.mxu0 0.0
    %278 = vmatprep.subr.mxu0 0.0
    %279 = vmatpush1.msra.mxu0 0.0
    %280 = vmatprep.subr.mxu0 0.0
    %281 = vmatpush1.msra.mxu0 0.0
    %282 = vmatprep.subr.mxu0 0.0
    %283 = vmatpush1.msra.mxu0 0.0
    %284 = vmatprep.subr.mxu0 0.0
    %285 = vmatpush1.msra.mxu0 0.0
    %286 = vmatprep.subr.mxu0 0.0
    %287 = vmatpush1.msra.mxu0 0.0
    %288 = vmatprep.subr.mxu0 0.0
    %289 = vmatpush1.msra.mxu0 0.0
    %290 = vmatprep.subr.mxu0 0.0
    %291 = vmatpush1.msra.mxu0 0.0
    %292 = vmatprep.subr.mxu0 0.0
    %293 = vmatpush1.msra.mxu0 0.0
    %294 = vmatprep.subr.mxu0 0.0
    %295 = vmatpush1.msra.mxu0 0.0
    %296 = vmatprep.subr.mxu0 0.0
    %297 = vmatpush1.msra.mxu0 0.0
    %298 = vmatprep.subr.mxu0 0.0
    %299 = vmatpush1.msra.mxu0 0.0
    %300 = vmatprep.subr.mxu0 0.0
    %301 = vmatpush1.msra.mxu0 0.0
    %302 = vmatprep.subr.mxu0 0.0
    %303 = vmatpush1.msra.mxu0 0.0
    %304 = vmatprep.subr.mxu0 0.0
    %305 = vmatpush1.msra.mxu0 0.0
    %306 = vmatprep.mubr.f32.mxu0 0.0
    %307 = vmatmul.mubr.f32.gmra.mrb[0].mxu0 %v237
    %v308 = vpop.f32.mrb[0].mxu0
    %v309 = vadd.f32 %v228, %v308
    %v310 = vpop.f32.mrb[0].mxu0
    %311 = vmatprep.mubr.f32.mxu0 0.0
    %312 = vmatmul.mubr.f32.gmra.mrb[0].mxu0 %v240
    %v313 = vpop.f32.mrb[0].mxu0
    %v314 = vadd.f32 %v233, %v313
    %v315 = vpop.f32.mrb[0].mxu0
    %316 = vdwg.mxu0
    %v317 = vadd.f32 %v89, %v309
    %v318 = vadd.f32 %v90, %v314
    %319 = vst [vmem:[#allocation11] sm:$0xff] %v317
    %320 = vst [vmem:[#allocation11 + $0x8] sm:$0x1f] %v318
    // Predicated region
    $region42: #{tpu_custom_call.1} parent=1 // pred_check
      _
    $region43: #{tpu_custom_call.1} parent=1 // pred_check_branch
      %322 = sbr.rel (0) target = $region45
    $region44: #{tpu_custom_call.1} parent=1 // pred_region
      %s324 = ssub.s32 256, 256
      %325 = vsyncadd [#allocation4], %s324
      %s326 = sshll.u32 [#allocation11], 4
      %s327 = int_to_ptr.vmem [resolvable:$true] %s326
      %332 = dma.vmem_to_hbm [thread:$0]  %s327, 256, %s5, [#allocation4], 128, 128, 8
    $region45: #{tpu_custom_call.1} parent=1 // pred_fallthru
      _
    // Predicated region
    $region46: #{tpu_custom_call.1} parent=1 // pred_check
      _
    $region47: #{tpu_custom_call.1} parent=1 // pred_check_branch
      %334 = sbr.rel (0) target = $region49
    $region48: #{tpu_custom_call.1} parent=1 // pred_region
      %335 = dma.done [#allocation4], 256
    $region49: #{tpu_custom_call.1} parent=1 // pred_fallthru
      _
    %336 = vsyncpa [#allocation3], 1
    %337 = vsyncpa [#allocation6], 1
    %338 = vsyncpa [#allocation9], 1
    %339 = vsyncpa [#allocation4], 1

</llo_original>
